<compile_context>
chip_gen: v5e
topology: v5e:2x2
jax: 0.10.0
libtpu: 0.0.40
codegen_flags: <defaults>
</compile_context>

<pallas_src>
import functools

import jax
import jax.numpy as jnp
from jax.experimental import pallas as pl
from jax.experimental.pallas import tpu as pltpu


def _round_up(n, m):
    return ((n + m - 1) // m) * m


def qcartpole_kernel(x_ref, w1_ref, b1_ref, w2_ref, b2_ref, w3_ref, b3_ref, o_ref):
    """One (features, TB) batch tile of the MLP. Activations: (F, TB)."""
    x = x_ref[...]                                                  # (4, TB) bf16

    # fc1 + ReLU (dropout: eval-mode identity).  MXU matmul, f32 accumulate,
    # bias add / ReLU in f32 vregs (v5e has no bf16 VPU path).
    h1 = jnp.dot(w1_ref[...], x, preferred_element_type=jnp.float32)
    h1 = jnp.maximum(h1 + b1_ref[...], 0.0)                         # (32, TB) f32

    # fc2 + ReLU (dropout: eval-mode identity).
    h2 = jnp.dot(w2_ref[...], h1.astype(jnp.bfloat16),
                 preferred_element_type=jnp.float32)
    h2 = jnp.maximum(h2 + b2_ref[...], 0.0)                         # (16, TB) f32

    # fc3 (Q-values).  Kernel is HBM/step-overhead bound, so the tiny K=16/M=2
    # matmul on the MXU is fine.
    q = jnp.dot(w3_ref[...], h2.astype(jnp.bfloat16),
                preferred_element_type=jnp.float32)
    o_ref[...] = (q + b3_ref[...]).astype(o_ref.dtype)              # (2, TB)


def qcartpole_forward_lanes(xt, params, *, tb=16384, out_dtype=jnp.bfloat16):
    """Lane-major entry point.

    xt: (4, B) activations (batch on the 128-lane axis), any float dtype.
    Returns (2, B) Q-values in `out_dtype`.  Preferred path for callers that
    can keep the (features, batch) layout end-to-end (no wrapper transposes).
    """
    B = xt.shape[1]

    # Tile selection:
    #   * lane axis a multiple of 128,
    #   * >= 2 grid steps whenever B allows (v7x megacore via "parallel"),
    #   * cap at the requested tb (default 16k; safe on all generations).
    tb = max(128, min(tb, _round_up(pl.cdiv(B, 2), 128)))
    grid = (pl.cdiv(B, tb),)

    out_t = pl.pallas_call(
        qcartpole_kernel,
        out_shape=jax.ShapeDtypeStruct((2, B), out_dtype),
        grid_spec=pltpu.PrefetchScalarGridSpec(
            num_scalar_prefetch=0,
            grid=grid,
            in_specs=[
                pl.BlockSpec((4, tb), lambda i: (0, i)),            # x tile
                pl.BlockSpec((32, 4), lambda i: (0, 0)),            # w1 (VMEM-resident)
                pl.BlockSpec((32, 1), lambda i: (0, 0)),            # b1
                pl.BlockSpec((16, 32), lambda i: (0, 0)),           # w2
                pl.BlockSpec((16, 1), lambda i: (0, 0)),            # b2
                pl.BlockSpec((2, 16), lambda i: (0, 0)),            # w3
                pl.BlockSpec((2, 1), lambda i: (0, 0)),             # b3
            ],
            out_specs=pl.BlockSpec((2, tb), lambda i: (0, i)),
        ),
        compiler_params=pltpu.CompilerParams(
            dimension_semantics=("parallel",),                      # v7x megacore
        ),
    )(
        xt.astype(jnp.bfloat16),
        params["w1"].astype(jnp.bfloat16), params["b1"],
        params["w2"].astype(jnp.bfloat16), params["b2"],
        params["w3"].astype(jnp.bfloat16), params["b3"],
    )
    return out_t


def _dense_forward(x, p):
    """Fused XLA dot chain — fastest path for small action-selection batches."""
    h1 = jnp.maximum(x @ p["w1"].T + p["b1"].T, 0.0)
    h2 = jnp.maximum(h1 @ p["w2"].T + p["b2"].T, 0.0)
    return h2 @ p["w3"].T + p["b3"].T


@functools.partial(jax.jit, static_argnames=("tb", "out_dtype", "min_pallas_batch"))
def qcartpole_forward(x, params, *, tb=16384, out_dtype=jnp.bfloat16,
                      min_pallas_batch=2048):
    """x: (B, 4) float32.  params: dict of w1,b1,w2,b2,w3,b3 (torch layout).

    Returns (B, 2) Q-values in `out_dtype` (bf16 by default — halves output
    HBM traffic; argmax over 2 actions is robust except for exact ties).
    """
    B = x.shape[0]

    # Small-batch fallback: below ~2k samples the pallas_call launch plus the
    # layout transposes cost more than a plain fused XLA MLP.
    if B < min_pallas_batch:
        return _dense_forward(x, params).astype(out_dtype)

    # Layout plumbing in the wrapper, not the kernel: transpose+convert fuse
    # into one XLA copy.  No padding — the kernel masks the partial last tile.
    xt = x.T.astype(jnp.bfloat16)                                   # (4, B)
    out_t = qcartpole_forward_lanes(xt, params, tb=tb, out_dtype=out_dtype)
    # Epilogue transpose in the (bf16) output dtype; callers that can consume
    # (2, B) lane-major should use qcartpole_forward_lanes and skip this.
    return out_t.T                                                  # (B, 2)


def init_params(key):
    """Deterministic synthetic parameters matching the PyTorch module's shapes.

    fc1: Linear(4, 32), fc2: Linear(32, 16), fc3: Linear(16, 2).
    Weights stored torch-style (out, in); biases as (out, 1) columns for the
    lane-dense (features, batch) compute layout.  torch default
    uniform(-1/sqrt(fan_in), 1/sqrt(fan_in)) init.
    """
    def linear(key, fan_in, fan_out):
        kw, kb = jax.random.split(key)
        bound = 1.0 / (fan_in ** 0.5)
        w = jax.random.uniform(kw, (fan_out, fan_in), jnp.float32, -bound, bound)
        b = jax.random.uniform(kb, (fan_out, 1), jnp.float32, -bound, bound)
        return w, b

    k1, k2, k3 = jax.random.split(key, 3)
    w1, b1 = linear(k1, 4, 32)
    w2, b2 = linear(k2, 32, 16)
    w3, b3 = linear(k3, 16, 2)
    return {"w1": w1, "b1": b1, "w2": w2, "b2": b2, "w3": w3, "b3": b3}


def reference_forward(x, p):
    """Pure-JAX f32 reference matching the PyTorch module (eval-mode dropout)."""
    h1 = jnp.maximum(x @ p["w1"].T + p["b1"].T, 0.0)
    h2 = jnp.maximum(h1 @ p["w2"].T + p["b2"].T, 0.0)
    return h2 @ p["w3"].T + p["b3"].T


if __name__ == "__main__":
    key = jax.random.PRNGKey(0)
    kx1, kx2, kp = jax.random.split(key, 3)
    params = init_params(kp)

    # 1) Small batch forced through the Pallas kernel (min_pallas_batch=0):
    #    exercises the single masked partial block (B < 128).
    B = 8
    x = jax.random.normal(kx1, (B, 4), dtype=jnp.float32)
    out = jax.block_until_ready(qcartpole_forward(x, params, min_pallas_batch=0))
    ref = reference_forward(x, params)
    assert out.shape == (B, 2), out.shape
    # bf16 operand/output storage with f32 accumulation -> loosened tolerance
    # vs the full-f32 reference (documented: argmax can flip on near-ties).
    assert jnp.allclose(out.astype(jnp.float32), ref, atol=3e-2, rtol=3e-2), \
        "pallas (small ragged batch) mismatch vs reference"

    # 2) 128-aligned batch wide enough for >= 2 grid steps (megacore path) and
    #    a masked partial last tile at TB granularity.
    B2 = 384
    x2 = jax.random.normal(kx2, (B2, 4), dtype=jnp.float32)
    out2 = jax.block_until_ready(qcartpole_forward(x2, params, min_pallas_batch=0))
    ref2 = reference_forward(x2, params)
    assert out2.shape == (B2, 2), out2.shape
    assert jnp.allclose(out2.astype(jnp.float32), ref2, atol=3e-2, rtol=3e-2), \
        "pallas (multi-tile batch) mismatch vs reference"

    # 3) Default dispatch at small B takes the fused-XLA fallback path.
    out3 = jax.block_until_ready(qcartpole_forward(x, params))
    assert jnp.allclose(out3.astype(jnp.float32), ref, atol=3e-2, rtol=3e-2), \
        "fallback path mismatch vs reference"

    print("KERNEL_OK")
</pallas_src>

<mosaic_0001>
module attributes {stable_mosaic.version = 11 : i64} {
  func.func @qcartpole_kernel(%arg0: i32, %arg1: memref<4x128xbf16, #tpu.memory_space<vmem>>, %arg2: memref<32x4xbf16, #tpu.memory_space<vmem>>, %arg3: memref<32x1xf32, #tpu.memory_space<vmem>>, %arg4: memref<16x32xbf16, #tpu.memory_space<vmem>>, %arg5: memref<16x1xf32, #tpu.memory_space<vmem>>, %arg6: memref<2x16xbf16, #tpu.memory_space<vmem>>, %arg7: memref<2x1xf32, #tpu.memory_space<vmem>>, %arg8: memref<2x128xbf16, #tpu.memory_space<vmem>>) attributes {dimension_semantics = [#tpu.dimension_semantics<parallel>], iteration_bounds = array<i64: 1>, scalar_prefetch = 0 : i64, scratch_operands = 0 : i64, tpu.core_type = #tpu.core_type<tc>, window_params = [{transform_indices = @transform_0, window_bounds = array<i64: 4, 128>}, {pipeline_mode = #tpu.pipeline_mode<synchronous>, transform_indices = @transform_1, window_bounds = array<i64: 32, 4>}, {pipeline_mode = #tpu.pipeline_mode<synchronous>, transform_indices = @transform_2, window_bounds = array<i64: 32, 1>}, {pipeline_mode = #tpu.pipeline_mode<synchronous>, transform_indices = @transform_3, window_bounds = array<i64: 16, 32>}, {pipeline_mode = #tpu.pipeline_mode<synchronous>, transform_indices = @transform_4, window_bounds = array<i64: 16, 1>}, {pipeline_mode = #tpu.pipeline_mode<synchronous>, transform_indices = @transform_5, window_bounds = array<i64: 2, 16>}, {pipeline_mode = #tpu.pipeline_mode<synchronous>, transform_indices = @transform_6, window_bounds = array<i64: 2, 1>}, {transform_indices = @transform_7, window_bounds = array<i64: 2, 128>}]} {
    %c0 = arith.constant 0 : index
    %c0_0 = arith.constant 0 : index
    %0 = vector.load %arg1[%c0, %c0_0] : memref<4x128xbf16, #tpu.memory_space<vmem>>, vector<4x128xbf16>
    %c0_1 = arith.constant 0 : index
    %c0_2 = arith.constant 0 : index
    %1 = vector.load %arg2[%c0_1, %c0_2] : memref<32x4xbf16, #tpu.memory_space<vmem>>, vector<32x4xbf16>
    %cst = arith.constant dense<0.000000e+00> : vector<32x128xf32>
    %2 = tpu.matmul %1, %0, %cst {dimension_numbers = #tpu.dot_dimension_numbers<[1], [0], [0], [1], [0, 0, 1, 1], [], []>} : vector<32x4xbf16>, vector<4x128xbf16>, vector<32x128xf32> -> vector<32x128xf32>
    %c0_3 = arith.constant 0 : index
    %c0_4 = arith.constant 0 : index
    %3 = vector.load %arg3[%c0_3, %c0_4] : memref<32x1xf32, #tpu.memory_space<vmem>>, vector<32x1xf32>
    %4 = vector.broadcast %3 : vector<32x1xf32> to vector<32x128xf32>
    %5 = arith.addf %2, %4 : vector<32x128xf32>
    %cst_5 = arith.constant 0.000000e+00 : f32
    %6 = vector.broadcast %cst_5 : f32 to vector<32x128xf32>
    %7 = arith.maximumf %5, %6 : vector<32x128xf32>
    %c0_6 = arith.constant 0 : index
    %c0_7 = arith.constant 0 : index
    %8 = vector.load %arg4[%c0_6, %c0_7] : memref<16x32xbf16, #tpu.memory_space<vmem>>, vector<16x32xbf16>
    %9 = arith.truncf %7 : vector<32x128xf32> to vector<32x128xbf16>
    %cst_8 = arith.constant dense<0.000000e+00> : vector<16x128xf32>
    %10 = tpu.matmul %8, %9, %cst_8 {dimension_numbers = #tpu.dot_dimension_numbers<[1], [0], [0], [1], [0, 0, 1, 1], [], []>} : vector<16x32xbf16>, vector<32x128xbf16>, vector<16x128xf32> -> vector<16x128xf32>
    %c0_9 = arith.constant 0 : index
    %c0_10 = arith.constant 0 : index
    %11 = vector.load %arg5[%c0_9, %c0_10] : memref<16x1xf32, #tpu.memory_space<vmem>>, vector<16x1xf32>
    %12 = vector.broadcast %11 : vector<16x1xf32> to vector<16x128xf32>
    %13 = arith.addf %10, %12 : vector<16x128xf32>
    %cst_11 = arith.constant 0.000000e+00 : f32
    %14 = vector.broadcast %cst_11 : f32 to vector<16x128xf32>
    %15 = arith.maximumf %13, %14 : vector<16x128xf32>
    %c0_12 = arith.constant 0 : index
    %c0_13 = arith.constant 0 : index
    %16 = vector.load %arg6[%c0_12, %c0_13] : memref<2x16xbf16, #tpu.memory_space<vmem>>, vector<2x16xbf16>
    %17 = arith.truncf %15 : vector<16x128xf32> to vector<16x128xbf16>
    %cst_14 = arith.constant dense<0.000000e+00> : vector<2x128xf32>
    %18 = tpu.matmul %16, %17, %cst_14 {dimension_numbers = #tpu.dot_dimension_numbers<[1], [0], [0], [1], [0, 0, 1, 1], [], []>} : vector<2x16xbf16>, vector<16x128xbf16>, vector<2x128xf32> -> vector<2x128xf32>
    %c0_15 = arith.constant 0 : index
    %c0_16 = arith.constant 0 : index
    %19 = vector.load %arg7[%c0_15, %c0_16] : memref<2x1xf32, #tpu.memory_space<vmem>>, vector<2x1xf32>
    %20 = vector.broadcast %19 : vector<2x1xf32> to vector<2x128xf32>
    %21 = arith.addf %18, %20 : vector<2x128xf32>
    %22 = arith.truncf %21 : vector<2x128xf32> to vector<2x128xbf16>
    %c0_17 = arith.constant 0 : index
    %c0_18 = arith.constant 0 : index
    %23 = vector.load %arg8[%c0_17, %c0_18] : memref<2x128xbf16, #tpu.memory_space<vmem>>, vector<2x128xbf16>
    tpu.vector_store %arg8[%c0_17, %c0_18], %22 {strides = array<i32>} : memref<2x128xbf16, #tpu.memory_space<vmem>>, vector<2x128xbf16>,
    return
  }
  func.func @transform_0(%arg0: i32) -> (i32, i32) {
    %c0_i32 = arith.constant 0 : i32
    %c0_i32_0 = arith.constant 0 : i32
    return %c0_i32, %arg0 : i32, i32
  }
  func.func @transform_1(%arg0: i32) -> (i32, i32) {
    %c0_i32 = arith.constant 0 : i32
    %c0_i32_0 = arith.constant 0 : i32
    %c0_i32_1 = arith.constant 0 : i32
    return %c0_i32, %c0_i32_0 : i32, i32
  }
  func.func @transform_2(%arg0: i32) -> (i32, i32) {
    %c0_i32 = arith.constant 0 : i32
    %c0_i32_0 = arith.constant 0 : i32
    %c0_i32_1 = arith.constant 0 : i32
    return %c0_i32, %c0_i32_0 : i32, i32
  }
  func.func @transform_3(%arg0: i32) -> (i32, i32) {
    %c0_i32 = arith.constant 0 : i32
    %c0_i32_0 = arith.constant 0 : i32
    %c0_i32_1 = arith.constant 0 : i32
    return %c0_i32, %c0_i32_0 : i32, i32
  }
  func.func @transform_4(%arg0: i32) -> (i32, i32) {
    %c0_i32 = arith.constant 0 : i32
    %c0_i32_0 = arith.constant 0 : i32
    %c0_i32_1 = arith.constant 0 : i32
    return %c0_i32, %c0_i32_0 : i32, i32
  }
  func.func @transform_5(%arg0: i32) -> (i32, i32) {
    %c0_i32 = arith.constant 0 : i32
    %c0_i32_0 = arith.constant 0 : i32
    %c0_i32_1 = arith.constant 0 : i32
    return %c0_i32, %c0_i32_0 : i32, i32
  }
  func.func @transform_6(%arg0: i32) -> (i32, i32) {
    %c0_i32 = arith.constant 0 : i32
    %c0_i32_0 = arith.constant 0 : i32
    %c0_i32_1 = arith.constant 0 : i32
    return %c0_i32, %c0_i32_0 : i32, i32
  }
  func.func @transform_7(%arg0: i32) -> (i32, i32) {
    %c0_i32 = arith.constant 0 : i32
    %c0_i32_0 = arith.constant 0 : i32
    return %c0_i32, %arg0 : i32, i32
  }
}

</mosaic_0001>

<llo_original>
// kernel: qcartpole_forward.1
$region0: #{qcartpole_forward.1}
  #allocation0 [shape = 'u32[]', space=smem, size = 0x4, offset = 0x4, fixed_abs, tag = 'smem constant byte address 0x4 - core index']
  #allocation1 [shape = 'u32[72,128]{1,0:T(1,128)}', space=vmem, size = 0x9000, scoped, tag = 'internal scratch']
  %s0 = inlined_call_operand.vmem [shape: bf16[4,8], index: 0, kind: input, shape index: {}]
  %s1 = inlined_call_operand.vmem [shape: bf16[32,4], index: 1, kind: input, shape index: {}]
  %s2 = inlined_call_operand.vmem [shape: f32[32,1], index: 2, kind: input, shape index: {}]
  %s3 = inlined_call_operand.vmem [shape: bf16[16,32], index: 3, kind: input, shape index: {}]
  %s4 = inlined_call_operand.vmem [shape: f32[16,1], index: 4, kind: input, shape index: {}]
  %s5 = inlined_call_operand.vmem [shape: bf16[2,16], index: 5, kind: input, shape index: {}]
  %s6 = inlined_call_operand.vmem [shape: f32[2,1], index: 6, kind: input, shape index: {}]
  %s7 = inlined_call_operand.hbm [shape: bf16[2,8], index: 7, kind: output, shape index: {}]
  %s8 = sld [smem:[#allocation0]]
  $region38: #{qcartpole_forward.1} parent=0
    _
  %s10 = ssub.s32 1, %s8
  %s11 = scalar_select 0, %s10, %s8
  $region1: #{qcartpole_forward.1} parent=0
    #allocation2 [shape = 'u8[512]{0}', space=vmem, size = 0x400, scoped, tag = 'output window, operand 0, single buffered']
    #allocation3 [shape = 's32[1]{0}', space=sflag, size = 0x4, scoped, tag = 'scoped memory for qcartpole_forward.1']
    %12 = vsyncpa [#allocation3], 0
    // Predicated region
    $region2: #{qcartpole_forward.1} parent=1 // pred_check
      _
    $region3: #{qcartpole_forward.1} parent=1 // pred_check_branch
      %14 = sbr.rel (0) target = $region5
    $region4: #{qcartpole_forward.1} parent=1 // pred_region
      _
    $region5: #{qcartpole_forward.1} parent=1 // pred_fallthru
      _
    // Predicated region
    $region6: #{qcartpole_forward.1} parent=1 // pred_check
      _
    $region7: #{qcartpole_forward.1} parent=1 // pred_check_branch
      %16 = sbr.rel (0) target = $region9
    $region8: #{qcartpole_forward.1} parent=1 // pred_region
      _
    $region9: #{qcartpole_forward.1} parent=1 // pred_fallthru
      _
    // Predicated region
    $region10: #{qcartpole_forward.1} parent=1 // pred_check
      _
    $region11: #{qcartpole_forward.1} parent=1 // pred_check_branch
      %18 = sbr.rel (0) target = $region13
    $region12: #{qcartpole_forward.1} parent=1 // pred_region
      _
    $region13: #{qcartpole_forward.1} parent=1 // pred_fallthru
      _
    // Predicated region
    $region14: #{qcartpole_forward.1} parent=1 // pred_check
      _
    $region15: #{qcartpole_forward.1} parent=1 // pred_check_branch
      %20 = sbr.rel (0) target = $region17
    $region16: #{qcartpole_forward.1} parent=1 // pred_region
      _
    $region17: #{qcartpole_forward.1} parent=1 // pred_fallthru
      _
    // Predicated region
    $region18: #{qcartpole_forward.1} parent=1 // pred_check
      _
    $region19: #{qcartpole_forward.1} parent=1 // pred_check_branch
      %22 = sbr.rel (0) target = $region21
    $region20: #{qcartpole_forward.1} parent=1 // pred_region
      _
    $region21: #{qcartpole_forward.1} parent=1 // pred_fallthru
      _
    // Predicated region
    $region22: #{qcartpole_forward.1} parent=1 // pred_check
      _
    $region23: #{qcartpole_forward.1} parent=1 // pred_check_branch
      %24 = sbr.rel (0) target = $region25
    $region24: #{qcartpole_forward.1} parent=1 // pred_region
      _
    $region25: #{qcartpole_forward.1} parent=1 // pred_fallthru
      _
    // Predicated region
    $region26: #{qcartpole_forward.1} parent=1 // pred_check
      _
    $region27: #{qcartpole_forward.1} parent=1 // pred_check_branch
      %26 = sbr.rel (0) target = $region29
    $region28: #{qcartpole_forward.1} parent=1 // pred_region
      _
    $region29: #{qcartpole_forward.1} parent=1 // pred_fallthru
      _
    %v28 = vld [vmem:[%s0] sm:$0x3]
    %v29 = vld [vmem:[%s1] sm:$0xf]
    %v30 = vld [vmem:[%s1 + $0x4] sm:$0xf]
    %v31 = vld [vmem:[%s1 + $0x8] sm:$0xf]
    %v32 = vld [vmem:[%s1 + $0xc] sm:$0xf]
    %v33 = vld [vmem:[%s2] sm:$0xff]
    %v34 = vld [vmem:[%s2 + $0x8] sm:$0xff]
    %v35 = vld [vmem:[%s2 + $0x10] sm:$0xff]
    %v36 = vld [vmem:[%s2 + $0x18] sm:$0xff]
    %38 = vset.pattern.permute.xlu0 0
    %39 = vperm.xlu0 %38, %v33
    %v40 = vpop.permute.xlu0 %39
    %43 = vset.pattern.permute.xlu0 0
    %44 = vperm.xlu0 %43, %v34
    %v45 = vpop.permute.xlu0 %44
    %48 = vset.pattern.permute.xlu0 0
    %49 = vperm.xlu0 %48, %v35
    %v50 = vpop.permute.xlu0 %49
    %53 = vset.pattern.permute.xlu0 0
    %54 = vperm.xlu0 %53, %v36
    %v55 = vpop.permute.xlu0 %54
    %v61 = vunpack.c.l.b16 %v29
    %v62 = vunpack.c.l.b16 %v30
    %v63 = vunpack.c.l.b16 %v31
    %v64 = vunpack.c.l.b16 %v32
    %v65 = vpack.c.b16 %v62, %v61
    %v66 = vpack.c.b16 %v64, %v63
    %vm67 = vcmask 31744
    %v69 = vsel %vm67, %v65, 0
    %v72 = vsel %vm67, %v66, 0
    %vm74 = vcmask 1041408
    %v76 = vsel %vm74, %v28, 0
    %78 = vmatpush.bf16.msra.mxu0 0
    %79 = vmatpush.bf16.msra.mxu0 0
    %80 = vmatpush.bf16.msra.mxu0 0
    %81 = vmatpush.bf16.msra.mxu0 0
    %82 = vmatpush.bf16.msra.mxu0 0
    %83 = vmatpush.bf16.msra.mxu0 0
    %84 = vmatpush.bf16.msra.mxu0 0
    %85 = vmatpush.bf16.msra.mxu0 %v76
    %86 = vmatmul.bf16.gmra.mxu0 %v69
    %v87 = vpop.f32.mrf.mxu0
    %v88 = vadd.f32 %v40, %v87
    %v89 = vpop.f32.mrf.mxu0
    %v90 = vadd.f32 %v45, %v89
    %91 = vmatmul.bf16.gmra.mxu0 %v72
    %v92 = vpop.f32.mrf.mxu0
    %v93 = vadd.f32 %v50, %v92
    %v94 = vpop.f32.mrf.mxu0
    %v95 = vadd.f32 %v55, %v94
    %96 = vdwg.mxu0
    %v97 = vmax.f32 %v88, 0.0
    %v98 = vmax.f32 %v90, 0.0
    %v99 = vmax.f32 %v93, 0.0
    %v100 = vmax.f32 %v95, 0.0
    %v101 = vld [vmem:[%s3] sm:$0xf]
    %v102 = vld [vmem:[%s3 + $0x4] sm:$0xf]
    %v103 = vpack.c.bf16 %v98, %v97
    %v104 = vpack.c.bf16 %v100, %v99
    %v105 = vld [vmem:[%s4] sm:$0xff]
    %v106 = vld [vmem:[%s4 + $0x8] sm:$0xff]
    %108 = vset.pattern.permute.xlu0 0
    %109 = vperm.xlu0 %108, %v105
    %v110 = vpop.permute.xlu0 %109
    %113 = vset.pattern.permute.xlu0 0
    %114 = vperm.xlu0 %113, %v106
    %v115 = vpop.permute.xlu0 %114
    %v119 = vunpack.c.l.b16 %v101
    %v120 = vunpack.c.l.b16 %v102
    %v121 = vpack.c.b16 %v120, %v119
    %vm122 = vcmask 261120
    %v124 = vsel %vm122, %v121, 0
    %126 = vmatpush.bf16.msra.mxu0 0
    %127 = vmatpush.bf16.msra.mxu0 0
    %128 = vmatpush.bf16.msra.mxu0 0
    %129 = vmatpush.bf16.msra.mxu0 0
    %130 = vmatpush.bf16.msra.mxu0 0
    %131 = vmatpush.bf16.msra.mxu0 0
    %132 = vmatpush.bf16.msra.mxu0 %v104
    %133 = vmatpush.bf16.msra.mxu0 %v103
    %134 = vmatmul.bf16.gmra.mxu0 %v124
    %v135 = vpop.f32.mrf.mxu0
    %v136 = vadd.f32 %v110, %v135
    %v137 = vpop.f32.mrf.mxu0
    %v138 = vadd.f32 %v115, %v137
    %139 = vdwg.mxu0
    %v140 = vmax.f32 %v136, 0.0
    %v141 = vmax.f32 %v138, 0.0
    %v142 = vld [vmem:[%s5] sm:$0x1]
    %v143 = vpack.c.bf16 %v141, %v140
    %v144 = vld [vmem:[%s6] sm:$0x3]
    %146 = vset.pattern.permute.xlu0 0
    %147 = vperm.xlu0 %146, %v144
    %v148 = vpop.permute.xlu0 %147
    %vm150 = vcmask 130048
    %v152 = vsel %vm150, %v142, 0
    %154 = vmatpush.bf16.msra.mxu0 0
    %155 = vmatpush.bf16.msra.mxu0 0
    %156 = vmatpush.bf16.msra.mxu0 0
    %157 = vmatpush.bf16.msra.mxu0 0
    %158 = vmatpush.bf16.msra.mxu0 0
    %159 = vmatpush.bf16.msra.mxu0 0
    %160 = vmatpush.bf16.msra.mxu0 0
    %161 = vmatpush.bf16.msra.mxu0 %v143
    %162 = vmatmul.bf16.gmra.mxu0 %v152
    %v163 = vpop.f32.mrf.mxu0
    %v164 = vadd.f32 %v148, %v163
    %v165 = vpop.f32.mrf.mxu0
    %166 = vdwg.mxu0
    %v167 = vpack.c.bf16 %v164, %v164
    %168 = vst [vmem:[#allocation2] sm:$0x1] %v167
    // Predicated region
    $region30: #{qcartpole_forward.1} parent=1 // pred_check
      _
    $region31: #{qcartpole_forward.1} parent=1 // pred_check_branch
      %170 = sbr.rel (0) target = $region33
    $region32: #{qcartpole_forward.1} parent=1 // pred_region
      %172 = vsyncadd [#allocation3], 0
      %s174 = sshll.u32 [#allocation2], 4
      %s175 = int_to_ptr.vmem [resolvable:$true] %s174
      %s176 = sshll.u32 %s7, 4
      %s177 = int_to_ptr.hbm [resolvable:$true] %s176
      %179 = dma.vmem_to_hbm [thread:$0]  %s175, 16, %s177, [#allocation3]
    $region33: #{qcartpole_forward.1} parent=1 // pred_fallthru
      _
    // Predicated region
    $region34: #{qcartpole_forward.1} parent=1 // pred_check
      _
    $region35: #{qcartpole_forward.1} parent=1 // pred_check_branch
      %181 = sbr.rel (0) target = $region37
    $region36: #{qcartpole_forward.1} parent=1 // pred_region
      %183 = dma.done [#allocation3], 16
    $region37: #{qcartpole_forward.1} parent=1 // pred_fallthru
      _
    %184 = vsyncpa [#allocation3], 1

</llo_original>
